<compile_context>
chip_gen: v7x
topology: tpu7x:2x2x1
jax: 0.10.0
libtpu: 0.0.40
codegen_flags: <defaults>
</compile_context>

<pallas_src>
import jax
import jax.numpy as jnp
from jax.experimental import pallas as pl
from jax.experimental.pallas import tpu as pltpu


_SQRT_2_OVER_PI = 0.7978845608028654          # sqrt(2 / pi)
_C2 = 0.044715 * _SQRT_2_OVER_PI              # folded coefficient for Horner form
_LANES = 128


def _sublane_granule(dtype):
    """Rows per packed sublane tile for this dtype (8/16/32 for 4/2/1-byte)."""
    itemsize = jnp.dtype(dtype).itemsize
    if itemsize >= 4:
        return 8
    if itemsize == 2:
        return 16
    return 32


def _gelu_kernel(x_ref, o_ref):
    # Whole (block_rows, 128) lane-dense tile.  Elementwise on VPU, tanh on EUP.
    x = x_ref[...].astype(jnp.float32)
    # Factored form: inner = sqrt(2/pi) * (x + 0.044715*x^3) = x*(C1 + C2*x*x)
    inner = x * (_SQRT_2_OVER_PI + _C2 * (x * x))
    h = 0.5 * x
    y = h + h * jnp.tanh(inner)
    o_ref[...] = y.astype(o_ref.dtype)


def gelu(x, *, block_bytes=4 * 1024 * 1024):
    """Tanh-approximation GELU, elementwise over any input shape."""
    orig_shape = x.shape
    dtype = x.dtype
    itemsize = jnp.dtype(dtype).itemsize
    granule = _sublane_granule(dtype)

    flat = x.reshape(-1)
    n = flat.size
    if n == 0:
        return x

    # Lay the data out as (rows, 128): lane-dense last dim, sublane-aligned rows.
    # Pad ONLY to the (sublane x lane) granule, never to a multiple of the block.
    rows = pl.cdiv(n, _LANES)
    rows_padded = max(granule, ((rows + granule - 1) // granule) * granule)
    padded_n = rows_padded * _LANES
    needs_pad = padded_n != n
    if needs_pad:
        flat = jnp.pad(flat, (0, padded_n - n))       # GELU(0) == 0, tail sliced off
    x2d = flat.reshape(rows_padded, _LANES)

    # Bytes-based block size (~block_bytes of the input dtype), rounded to granule.
    max_block_rows = max(
        granule, (block_bytes // (_LANES * itemsize) // granule) * granule)
    block_rows = min(max_block_rows, rows_padded)

    # v7x megacore: if everything fits in one block but there are >= 2 granules
    # of rows, split into two balanced blocks so both TensorCores get work.
    if rows_padded <= block_rows and rows_padded >= 2 * granule:
        half = pl.cdiv(rows_padded, 2)
        block_rows = ((half + granule - 1) // granule) * granule

    # Ragged last block is allowed: Pallas pads the OOB reads and masks the
    # OOB writes, which is safe for a pure elementwise op.
    grid = (pl.cdiv(rows_padded, block_rows),)

    out2d = pl.pallas_call(
        _gelu_kernel,
        out_shape=jax.ShapeDtypeStruct((rows_padded, _LANES), dtype),
        grid_spec=pltpu.PrefetchScalarGridSpec(
            num_scalar_prefetch=0,
            grid=grid,
            in_specs=[pl.BlockSpec((block_rows, _LANES), lambda i: (i, 0))],
            out_specs=pl.BlockSpec((block_rows, _LANES), lambda i: (i, 0)),
        ),
        compiler_params=pltpu.CompilerParams(
            dimension_semantics=("parallel",),   # megacore split on v7x; no-op v5e/v6e
        ),
    )(x2d)

    if needs_pad:
        return out2d.reshape(-1)[:n].reshape(orig_shape)
    return out2d.reshape(orig_shape)


def reference(x):
    """Pure-JAX reference matching the PyTorch forward exactly."""
    xf = x.astype(jnp.float32)
    return (0.5 * xf * (1.0 + jnp.tanh(_SQRT_2_OVER_PI *
                                       (xf + 0.044715 * jnp.power(xf, 3))))
            ).astype(x.dtype)


if __name__ == "__main__":
    key = jax.random.PRNGKey(0)
    k0, k1, k2, k3, k4 = jax.random.split(key, 5)

    # 1) Module-scale shape (batch=2, seq=8, hidden=32), f32, padded path.
    x = jax.random.normal(k0, (2, 8, 32), dtype=jnp.float32)
    out = jax.block_until_ready(gelu(x))
    assert out.shape == x.shape
    assert jnp.allclose(out, reference(x), atol=1e-5, rtol=1e-5)

    # 2) Aligned f32 shape (fast path, no pad / no slice).
    xa = jax.random.normal(k1, (8, 128), dtype=jnp.float32)
    outa = jax.block_until_ready(gelu(xa))
    assert jnp.allclose(outa, reference(xa), atol=1e-5, rtol=1e-5)

    # 3) Aligned bf16 shape (dtype-aware granule fast path).
    xb = jax.random.normal(k2, (16, 128), dtype=jnp.bfloat16)
    outb = jax.block_until_ready(gelu(xb))
    assert jnp.allclose(outb.astype(jnp.float32),
                        reference(xb).astype(jnp.float32),
                        atol=1e-2, rtol=1e-2)

    # 4) Ragged last grid block (rows % block_rows != 0) with a tiny block.
    xr = jax.random.normal(k3, (40, 128), dtype=jnp.float32)
    outr = jax.block_until_ready(gelu(xr, block_bytes=16 * 128 * 4))
    assert jnp.allclose(outr, reference(xr), atol=1e-5, rtol=1e-5)

    # 5) Megacore split path (grid forced to >= 2 blocks).
    xm = jax.random.normal(k4, (64, 128), dtype=jnp.float32)
    outm = jax.block_until_ready(gelu(xm))
    assert jnp.allclose(outm, reference(xm), atol=1e-5, rtol=1e-5)

    print("KERNEL_OK")
</pallas_src>

<mosaic_0001>
module attributes {stable_mosaic.version = 11 : i64} {
  func.func @_gelu_kernel(%arg0: i32, %arg1: memref<8x128xf32, #tpu.memory_space<vmem>>, %arg2: memref<8x128xf32, #tpu.memory_space<vmem>>) attributes {dimension_semantics = [#tpu.dimension_semantics<parallel>], iteration_bounds = array<i64: 1>, scalar_prefetch = 0 : i64, scratch_operands = 0 : i64, tpu.core_type = #tpu.core_type<tc>, window_params = [{transform_indices = @transform_0, window_bounds = array<i64: 8, 128>}, {transform_indices = @transform_1, window_bounds = array<i64: 8, 128>}]} {
    %c0 = arith.constant 0 : index
    %c0_0 = arith.constant 0 : index
    %0 = vector.load %arg1[%c0, %c0_0] : memref<8x128xf32, #tpu.memory_space<vmem>>, vector<8x128xf32>
    %1 = arith.mulf %0, %0 : vector<8x128xf32>
    %cst = arith.constant 0.0356774069 : f32
    %2 = vector.broadcast %cst : f32 to vector<8x128xf32>
    %3 = arith.mulf %2, %1 : vector<8x128xf32>
    %cst_1 = arith.constant 0.797884583 : f32
    %4 = vector.broadcast %cst_1 : f32 to vector<8x128xf32>
    %5 = arith.addf %4, %3 : vector<8x128xf32>
    %6 = arith.mulf %0, %5 : vector<8x128xf32>
    %cst_2 = arith.constant 5.000000e-01 : f32
    %7 = vector.broadcast %cst_2 : f32 to vector<8x128xf32>
    %8 = arith.mulf %7, %0 : vector<8x128xf32>
    %9 = math.tanh %6 : vector<8x128xf32>
    %10 = arith.mulf %8, %9 : vector<8x128xf32>
    %11 = arith.addf %8, %10 : vector<8x128xf32>
    %c0_3 = arith.constant 0 : index
    %c0_4 = arith.constant 0 : index
    %12 = vector.load %arg2[%c0_3, %c0_4] : memref<8x128xf32, #tpu.memory_space<vmem>>, vector<8x128xf32>
    tpu.vector_store %arg2[%c0_3, %c0_4], %11 {strides = array<i32>} : memref<8x128xf32, #tpu.memory_space<vmem>>, vector<8x128xf32>,
    return
  }
  func.func @transform_0(%arg0: i32) -> (i32, i32) {
    %c0_i32 = arith.constant 0 : i32
    %c0_i32_0 = arith.constant 0 : i32
    return %arg0, %c0_i32 : i32, i32
  }
  func.func @transform_1(%arg0: i32) -> (i32, i32) {
    %c0_i32 = arith.constant 0 : i32
    %c0_i32_0 = arith.constant 0 : i32
    return %arg0, %c0_i32 : i32, i32
  }
}

</mosaic_0001>

<llo_original>
// kernel: tpu_custom_call.1
$region0: #{tpu_custom_call.1}
  #allocation0 [shape = 'u32[]', space=smem, size = 0x4, offset = 0x4, fixed_abs, tag = 'smem constant byte address 0x4 - core index']
  #allocation1 [shape = 'u32[144,128]{1,0:T(1,128)}', space=vmem, size = 0x12000, scoped, tag = 'internal scratch']
  %s0 = inlined_call_operand.hbm [shape: f32[8,128], index: 0, kind: input, shape index: {}]
  %s1 = inlined_call_operand.hbm [shape: f32[8,128], index: 1, kind: output, shape index: {}]
  %s2 = sld [smem:[#allocation0]]
  $region18: #{tpu_custom_call.1} parent=0
    _
  %s4 = ssub.s32 1, %s2
  %s5 = scalar_select 0, %s4, %s2
  $region1: #{tpu_custom_call.1} parent=0
    #allocation2 [shape = 'u8[4096]{0}', space=vmem, size = 0x1000, scoped, tag = 'input window, operand 0, single buffered']
    #allocation3 [shape = 's32[1]{0}', space=sflag, size = 0x4, scoped, tag = 'scoped memory for tpu_custom_call.1']
    #allocation4 [shape = 's32[1]{0}', space=sflag, size = 0x4, scoped, tag = 'scoped memory for tpu_custom_call.1']
    #allocation5 [shape = 'u8[4096]{0}', space=vmem, size = 0x1000, scoped, tag = 'output window, operand 0, single buffered']
    %6 = vsyncpa [#allocation3], 0
    %7 = vsyncpa [#allocation4], 0
    // Predicated region
    $region2: #{tpu_custom_call.1} parent=1 // pred_check
      _
    $region3: #{tpu_custom_call.1} parent=1 // pred_check_branch
      %9 = sbr.rel (0) target = $region5
    $region4: #{tpu_custom_call.1} parent=1 // pred_region
      %s11 = ssub.s32 128, 128
      %12 = vsyncadd [#allocation3], %s11
      %s14 = sshll.u32 [#allocation2], 4
      %s15 = int_to_ptr.vmem [resolvable:$true] %s14
      %17 = dma.hbm_to_vmem [thread:$0]  %s0, 128, %s15, [#allocation3]
    $region5: #{tpu_custom_call.1} parent=1 // pred_fallthru
      _
    // Predicated region
    $region6: #{tpu_custom_call.1} parent=1 // pred_check
      _
    $region7: #{tpu_custom_call.1} parent=1 // pred_check_branch
      %19 = sbr.rel (0) target = $region9
    $region8: #{tpu_custom_call.1} parent=1 // pred_region
      %20 = dma.done [#allocation3], 128
    $region9: #{tpu_custom_call.1} parent=1 // pred_fallthru
      _
    %v21 = vld [vmem:[#allocation2] sm:$0xff]
    %v22 = vmul.f32 %v21, %v21
    %v23 = vmul.f32 %v22, 0.035677407
    %v24 = vadd.f32 %v23, 0.7978846
    %v25 = vmul.f32 %v21, %v24
    %v26 = vmul.f32 %v21, 0.5
    %v27 = vtanh.pop %v25
    %v28 = vmul.f32 %v26, %v27
    %v29 = vadd.f32 %v26, %v28
    %30 = vst [vmem:[#allocation5] sm:$0xff] %v29
    // Predicated region
    $region10: #{tpu_custom_call.1} parent=1 // pred_check
      _
    $region11: #{tpu_custom_call.1} parent=1 // pred_check_branch
      %32 = sbr.rel (0) target = $region13
    $region12: #{tpu_custom_call.1} parent=1 // pred_region
      %s34 = ssub.s32 128, 128
      %35 = vsyncadd [#allocation4], %s34
      %s37 = sshll.u32 [#allocation5], 4
      %s38 = int_to_ptr.vmem [resolvable:$true] %s37
      %40 = dma.vmem_to_hbm [thread:$0]  %s38, 128, %s1, [#allocation4]
    $region13: #{tpu_custom_call.1} parent=1 // pred_fallthru
      _
    // Predicated region
    $region14: #{tpu_custom_call.1} parent=1 // pred_check
      _
    $region15: #{tpu_custom_call.1} parent=1 // pred_check_branch
      %42 = sbr.rel (0) target = $region17
    $region16: #{tpu_custom_call.1} parent=1 // pred_region
      %43 = dma.done [#allocation4], 128
    $region17: #{tpu_custom_call.1} parent=1 // pred_fallthru
      _
    %44 = vsyncpa [#allocation3], 1
    %45 = vsyncpa [#allocation4], 1

</llo_original>
